<compile_context>
chip_gen: v5e
topology: v5e:2x2
jax: 0.10.0
libtpu: 0.0.40
codegen_flags: <defaults>
</compile_context>

<pallas_src>
import inspect
import math
from functools import partial

import jax
import jax.numpy as jnp
from jax import lax
from jax.experimental import pallas as pl
from jax.experimental.pallas import tpu as pltpu

# Finite "minus infinity" for the running max. A finite value keeps the online softmax
# NaN-free when a visited KV tile is fully outside the band for some query rows
# (exp(m_prev - m_new) stays well defined; masked columns use -inf so exp(-inf)=0).
_NEG_BIG = -1e30


def _sublane_mult(dtype):
    # Min second-to-last block granularity: 8 for 32-bit, 16 for 16-bit dtypes.
    return max(8, 32 // jnp.dtype(dtype).itemsize)


def _choose_tile(n, target, mult):
    """Largest multiple-of-`mult` divisor of n that is <= target (or n itself)."""
    if n <= target:
        return n
    t = (target // mult) * mult
    while t >= mult:
        if n % t == 0:
            return t
        t -= mult
    return n  # fall back to the full dimension (always a legal block)


def _supports_pipeline_mode():
    # Guarded so the kernel still builds on jax versions without BlockSpec(pipeline_mode=...).
    try:
        return hasattr(pl, "Buffered") and \
            "pipeline_mode" in inspect.signature(pl.BlockSpec).parameters
    except (TypeError, ValueError):
        return False


# --------------------------- Pass 1: fused QKV projection ---------------------------

def _qkv_proj_kernel(x_ref, w_ref, b_ref, q_ref, kv_ref, *, d_model):
    # One (Ts, D) x-tile per grid step; fused (D, 3D) weight -> single MXU pass.
    y = jnp.dot(x_ref[0], w_ref[...], preferred_element_type=jnp.float32)
    y = y + b_ref[...]                                   # (1, 3D) broadcast, f32
    q_ref[0] = y[:, :d_model].astype(q_ref.dtype)        # Q already scaled by 1/sqrt(depth)
    kv_ref[0] = y[:, d_model:].astype(kv_ref.dtype)      # fused [K | V]


# --------------------------- Pass 2: banded flash attention -------------------------

def _local_attn_kernel(q_ref, kv_ref, o_ref, m_ref, l_ref, acc_ref, qh_ref, *,
                       num_heads, depth, d_model, window_size,
                       tq, tk, nk_tiles, off_tiles, exp_dtype, approx_recip):
    i = pl.program_id(1)            # query-tile index
    kl = pl.program_id(2)           # local kv step
    # First kv tile that can intersect the band of query tile i. The static off_tiles
    # shift keeps the numerator non-negative so trace-time division == floor division.
    j0 = (i * tq - window_size + off_tiles * tk) // tk - off_tiles
    j0 = jnp.maximum(j0, 0)
    j = j0 + kl                      # kv tile visited at this step

    @pl.when(kl == 0)
    def _init():
        m_ref[...] = jnp.full_like(m_ref, _NEG_BIG)
        l_ref[...] = jnp.zeros_like(l_ref)
        acc_ref[...] = jnp.zeros_like(acc_ref)
        # Head-split Q once per query tile; reused across every kv step.
        q2d = q_ref[0]                                                  # (tq, D)
        qh_ref[...] = jnp.stack(
            [q2d[:, h * depth:(h + 1) * depth] for h in range(num_heads)], axis=0)

    # j >= 0 and the lower band edge hold by construction of j0; only check the
    # upper band edge and the kv range.
    valid = jnp.logical_and(j < nk_tiles,
                            j * tk <= i * tq + (tq - 1) + window_size)

    @pl.when(valid)
    def _step():
        kv = kv_ref[0]                                                  # (tk, 2D)
        kh = jnp.stack([kv[:, h * depth:(h + 1) * depth]
                        for h in range(num_heads)], axis=0)             # (H, tk, depth)
        vh = jnp.stack([kv[:, d_model + h * depth:d_model + (h + 1) * depth]
                        for h in range(num_heads)], axis=0)             # (H, tk, depth)

        # One head-batched MXU pass: (H, tq, depth) x (H, tk, depth) -> (H, tq, tk).
        s = jnp.einsum('hqd,hkd->hqk', qh_ref[...], kh,
                       preferred_element_type=jnp.float32)

        # Band mask: constant iota difference + scalar tile offset, broadcast over heads.
        diff = (lax.broadcasted_iota(jnp.int32, (tq, tk), 1)
                - lax.broadcasted_iota(jnp.int32, (tq, tk), 0))         # col - row
        in_band = jnp.abs(diff + (j * tk - i * tq)) <= window_size
        s = jnp.where(in_band[None, :, :], s, -jnp.inf)

        # Online (flash) softmax, vectorized over all heads at once.
        m_prev = m_ref[...]                                             # (H, tq, 1)
        m_new = jnp.maximum(m_prev, jnp.max(s, axis=-1, keepdims=True))
        alpha = jnp.exp(m_prev - m_new)
        p = jnp.exp((s - m_new).astype(exp_dtype))                      # (H, tq, tk)
        l_ref[...] = alpha * l_ref[...] + jnp.sum(p.astype(jnp.float32),
                                                  axis=-1, keepdims=True)
        m_ref[...] = m_new
        pv = jnp.einsum('hqk,hkd->hqd', p.astype(vh.dtype), vh,
                        preferred_element_type=jnp.float32)             # (H, tq, depth)
        acc_ref[...] = alpha * acc_ref[...] + pv

    @pl.when(kl == pl.num_programs(2) - 1)
    def _finalize():
        inv_l = pl.reciprocal(l_ref[...], approx=approx_recip)          # (H, tq, 1)
        out_h = acc_ref[...] * inv_l                                    # (H, tq, depth)
        # Re-interleave heads into (tq, D); ONE lane-dense store per query tile.
        o_ref[0] = jnp.concatenate(
            [out_h[h] for h in range(num_heads)], axis=-1).astype(o_ref.dtype)


# ------------------------------------ wrapper ----------------------------------------

def multi_head_local_attention(x, wq_t, wk_t, wv_t, bq, bk, bv, *,
                               num_heads, window_size,
                               compute_dtype=jnp.bfloat16,
                               q_tile=512, kv_tile=512, proj_tile=1024,
                               exp_dtype=None, approx_recip=True):
    """Banded multi-head self-attention matching the PyTorch module's forward.

    wq_t/wk_t/wv_t must be the transposed nn.Linear weights (so q = x @ wq_t + bq).
    exp_dtype: dtype for the softmax numerator exp (set jnp.bfloat16 on v6e/v7x to
    relieve the EUP slot; keep the f32 default on v5e). approx_recip: use the EUP
    approximate reciprocal in the final normalization.
    """
    assert window_size >= 0
    B, S, D = x.shape
    assert D % num_heads == 0
    depth = D // num_heads
    scale = 1.0 / math.sqrt(depth)
    exp_dtype = jnp.float32 if exp_dtype is None else jnp.dtype(exp_dtype)
    mult = max(_sublane_mult(compute_dtype), _sublane_mult(x.dtype))

    # Fused QKV weight / bias; score scale folded into the Q columns (free at runtime).
    w_qkv = jnp.concatenate([wq_t * scale, wk_t, wv_t], axis=1).astype(compute_dtype)
    b_qkv = jnp.concatenate([bq * scale, bk, bv]).reshape(1, 3 * D).astype(jnp.float32)
    x_c = x.astype(compute_dtype)

    # ---------------- Pass 1: fused QKV projection ----------------
    # TODO(synk): for very large d_model on v7x (64 MiB VMEM), tile the fused (D, 3D)
    #             weight over its output columns instead of keeping it fully resident.
    Ts = _choose_tile(S, proj_tile, mult)
    nst = S // Ts
    q, kv = pl.pallas_call(
        partial(_qkv_proj_kernel, d_model=D),
        out_shape=(jax.ShapeDtypeStruct((B, S, D), compute_dtype),
                   jax.ShapeDtypeStruct((B, S, 2 * D), compute_dtype)),
        grid_spec=pltpu.PrefetchScalarGridSpec(
            num_scalar_prefetch=0,
            grid=(B, nst),
            in_specs=[
                pl.BlockSpec((1, Ts, D), lambda b, s: (b, s, 0)),
                pl.BlockSpec((D, 3 * D), lambda b, s: (0, 0)),
                pl.BlockSpec((1, 3 * D), lambda b, s: (0, 0)),
            ],
            out_specs=(pl.BlockSpec((1, Ts, D), lambda b, s: (b, s, 0)),
                       pl.BlockSpec((1, Ts, 2 * D), lambda b, s: (b, s, 0))),
        ),
        compiler_params=pltpu.CompilerParams(
            dimension_semantics=("parallel", "parallel")),
    )(x_c, w_qkv, b_qkv)

    # -------- Pass 2: banded attention over (batch, q-tile, local kv-tile) --------
    Tq = _choose_tile(S, q_tile, mult)
    Tk = _choose_tile(S, kv_tile, mult)
    nq, nk = S // Tq, S // Tk
    W = window_size

    # Static (Python) per-query-tile kv-tile range -> exact inner grid extent.
    def _jf(i):
        return max((i * Tq - W) // Tk, 0)

    def _jl(i):
        return min((i * Tq + Tq - 1 + W) // Tk, nk - 1)

    n_loc = max(_jl(i) - _jf(i) + 1 for i in range(nq))
    off_tiles = (W // Tk) + 1          # keeps the in-kernel floor-division numerator >= 0

    def q_map(b, i, kl):
        return (b, i, 0)

    def kv_map(b, i, kl):
        j0 = (i * Tq - W + off_tiles * Tk) // Tk - off_tiles
        j = jnp.maximum(j0, 0) + kl
        return (b, jnp.minimum(j, nk - 1), 0)   # clamp so skipped steps still DMA legally

    kv_kwargs = {}
    if _supports_pipeline_mode():
        kv_kwargs["pipeline_mode"] = pl.Buffered(3)   # deepen the hot KV pipeline
    kv_spec = pl.BlockSpec((1, Tk, 2 * D), kv_map, **kv_kwargs)

    kernel = partial(_local_attn_kernel, num_heads=num_heads, depth=depth, d_model=D,
                     window_size=W, tq=Tq, tk=Tk, nk_tiles=nk, off_tiles=off_tiles,
                     exp_dtype=exp_dtype, approx_recip=approx_recip)

    return pl.pallas_call(
        kernel,
        out_shape=jax.ShapeDtypeStruct((B, S, D), x.dtype),
        grid_spec=pltpu.PrefetchScalarGridSpec(
            num_scalar_prefetch=0,
            grid=(B, nq, n_loc),
            in_specs=[pl.BlockSpec((1, Tq, D), q_map), kv_spec],
            out_specs=pl.BlockSpec((1, Tq, D), q_map),
            scratch_shapes=[
                pltpu.VMEM((num_heads, Tq, 1), jnp.float32),       # running row max
                pltpu.VMEM((num_heads, Tq, 1), jnp.float32),       # running denominator
                pltpu.VMEM((num_heads, Tq, depth), jnp.float32),   # output accumulator
                pltpu.VMEM((num_heads, Tq, depth), compute_dtype), # head-split Q
            ],
        ),
        compiler_params=pltpu.CompilerParams(
            dimension_semantics=("parallel", "parallel", "arbitrary")),
    )(q, kv)


def reference_jax(x, wq_t, wk_t, wv_t, bq, bk, bv, *, num_heads, window_size):
    """Pure-JAX reproduction of the PyTorch forward (highest-precision matmuls)."""
    B, S, D = x.shape
    depth = D // num_heads
    hp = jax.lax.Precision.HIGHEST
    q = jnp.matmul(x, wq_t, precision=hp) + bq
    k = jnp.matmul(x, wk_t, precision=hp) + bk
    v = jnp.matmul(x, wv_t, precision=hp) + bv
    split = lambda t: t.reshape(B, S, num_heads, depth).transpose(0, 2, 1, 3)
    Q, K, V = split(q), split(k), split(v)
    scores = jnp.einsum('bhqd,bhkd->bhqk', Q, K, precision=hp) / math.sqrt(depth)
    idx = jnp.arange(S)
    mask = jnp.abs(idx[None, :] - idx[:, None]) > window_size
    scores = jnp.where(mask[None, None], -jnp.inf, scores)
    w = jax.nn.softmax(scores, axis=-1)
    out = jnp.einsum('bhqk,bhkd->bhqd', w, V, precision=hp)
    return out.transpose(0, 2, 1, 3).reshape(B, S, D)


if __name__ == "__main__":
    d_model, num_heads, window_size = 32, 4, 2
    batch, seq_len = 2, 32

    # Parameter init mirroring the PyTorch __init__: weights = 1, biases = 0.
    wq_t = jnp.ones((d_model, d_model), jnp.float32)   # == Wq^T (all-ones either way)
    wk_t = jnp.ones((d_model, d_model), jnp.float32)
    wv_t = jnp.ones((d_model, d_model), jnp.float32)
    bq = jnp.zeros((d_model,), jnp.float32)
    bk = jnp.zeros((d_model,), jnp.float32)
    bv = jnp.zeros((d_model,), jnp.float32)

    key = jax.random.PRNGKey(0)
    # Small-magnitude activations keep the (all-ones-weight) softmax out of the
    # saturated one-hot regime so both tolerance checks below are meaningful.
    x = 0.05 * jax.random.normal(key, (batch, seq_len, d_model), dtype=jnp.float32)

    ref = reference_jax(x, wq_t, wk_t, wv_t, bq, bk, bv,
                        num_heads=num_heads, window_size=window_size)

    # f32 verification path. Small, unequal tiles exercise the decoupled Tq/Tk path,
    # kv index clamping, out-of-band step skipping and the online-softmax rescale.
    out = multi_head_local_attention(
        x, wq_t, wk_t, wv_t, bq, bk, bv,
        num_heads=num_heads, window_size=window_size,
        compute_dtype=jnp.float32, q_tile=8, kv_tile=16, proj_tile=16)
    out = jax.block_until_ready(out)
    assert out.shape == (batch, seq_len, d_model)
    err = float(jnp.max(jnp.abs(out - ref)))
    assert jnp.allclose(out, ref, atol=1e-2, rtol=2e-2), \
        f"f32 kernel mismatch vs reference: max abs err {err}"

    # bf16 MXU-input production path (f32 accumulation / f32 softmax state),
    # now checked against the reference with a bf16-appropriate tolerance.
    out_bf16 = multi_head_local_attention(
        x, wq_t, wk_t, wv_t, bq, bk, bv,
        num_heads=num_heads, window_size=window_size,
        compute_dtype=jnp.bfloat16, q_tile=16, kv_tile=16, proj_tile=16)
    out_bf16 = jax.block_until_ready(out_bf16)
    assert out_bf16.shape == (batch, seq_len, d_model)
    err16 = float(jnp.max(jnp.abs(out_bf16.astype(jnp.float32) - ref)))
    assert jnp.allclose(out_bf16.astype(jnp.float32), ref, atol=5e-2, rtol=5e-2), \
        f"bf16 kernel mismatch vs reference: max abs err {err16}"

    print("KERNEL_OK")
</pallas_src>

<mosaic_0001>
module attributes {stable_mosaic.version = 11 : i64} {
  func.func @_qkv_proj_kernel(%arg0: i32, %arg1: i32, %arg2: memref<1x16x32xf32, #tpu.memory_space<vmem>>, %arg3: memref<32x96xf32, #tpu.memory_space<vmem>>, %arg4: memref<1x96xf32, #tpu.memory_space<vmem>>, %arg5: memref<1x16x32xf32, #tpu.memory_space<vmem>>, %arg6: memref<1x16x64xf32, #tpu.memory_space<vmem>>) attributes {dimension_semantics = [#tpu.dimension_semantics<parallel>, #tpu.dimension_semantics<parallel>], iteration_bounds = array<i64: 2, 2>, scalar_prefetch = 0 : i64, scratch_operands = 0 : i64, tpu.core_type = #tpu.core_type<tc>, window_params = [{transform_indices = @transform_0, window_bounds = array<i64: 1, 16, 32>}, {pipeline_mode = #tpu.pipeline_mode<synchronous>, transform_indices = @transform_1, window_bounds = array<i64: 32, 96>}, {pipeline_mode = #tpu.pipeline_mode<synchronous>, transform_indices = @transform_2, window_bounds = array<i64: 1, 96>}, {transform_indices = @transform_3, window_bounds = array<i64: 1, 16, 32>}, {transform_indices = @transform_4, window_bounds = array<i64: 1, 16, 64>}]} {
    %c0 = arith.constant 0 : index
    %c0_0 = arith.constant 0 : index
    %c0_1 = arith.constant 0 : index
    %0 = vector.load %arg2[%c0, %c0_0, %c0_1] : memref<1x16x32xf32, #tpu.memory_space<vmem>>, vector<1x16x32xf32>
    %1 = vector.shape_cast %0 : vector<1x16x32xf32> to vector<16x32xf32>
    %c0_2 = arith.constant 0 : index
    %c0_3 = arith.constant 0 : index
    %2 = vector.load %arg3[%c0_2, %c0_3] : memref<32x96xf32, #tpu.memory_space<vmem>>, vector<32x96xf32>
    %cst = arith.constant dense<0.000000e+00> : vector<16x96xf32>
    %3 = tpu.matmul %1, %2, %cst {dimension_numbers = #tpu.dot_dimension_numbers<[1], [0], [0], [1], [0, 0, 1, 1], [], []>} : vector<16x32xf32>, vector<32x96xf32>, vector<16x96xf32> -> vector<16x96xf32>
    %c0_4 = arith.constant 0 : index
    %c0_5 = arith.constant 0 : index
    %4 = vector.load %arg4[%c0_4, %c0_5] : memref<1x96xf32, #tpu.memory_space<vmem>>, vector<1x96xf32>
    %5 = vector.broadcast %4 : vector<1x96xf32> to vector<16x96xf32>
    %6 = arith.addf %3, %5 : vector<16x96xf32>
    %7 = vector.extract_strided_slice %6 {offsets = [0, 0], sizes = [16, 32], strides = [1, 1]} : vector<16x96xf32> to vector<16x32xf32>
    %c0_6 = arith.constant 0 : index
    %c0_7 = arith.constant 0 : index
    %c0_8 = arith.constant 0 : index
    %8 = vector.load %arg5[%c0_6, %c0_7, %c0_8] : memref<1x16x32xf32, #tpu.memory_space<vmem>>, vector<1x16x32xf32>
    %9 = vector.shape_cast %8 : vector<1x16x32xf32> to vector<16x32xf32>
    %10 = vector.shape_cast %7 : vector<16x32xf32> to vector<1x16x32xf32>
    tpu.vector_store %arg5[%c0_6, %c0_7, %c0_8], %10 {strides = array<i32>} : memref<1x16x32xf32, #tpu.memory_space<vmem>>, vector<1x16x32xf32>,
    %11 = vector.extract_strided_slice %6 {offsets = [0, 32], sizes = [16, 64], strides = [1, 1]} : vector<16x96xf32> to vector<16x64xf32>
    %c0_9 = arith.constant 0 : index
    %c0_10 = arith.constant 0 : index
    %c0_11 = arith.constant 0 : index
    %12 = vector.load %arg6[%c0_9, %c0_10, %c0_11] : memref<1x16x64xf32, #tpu.memory_space<vmem>>, vector<1x16x64xf32>
    %13 = vector.shape_cast %12 : vector<1x16x64xf32> to vector<16x64xf32>
    %14 = vector.shape_cast %11 : vector<16x64xf32> to vector<1x16x64xf32>
    tpu.vector_store %arg6[%c0_9, %c0_10, %c0_11], %14 {strides = array<i32>} : memref<1x16x64xf32, #tpu.memory_space<vmem>>, vector<1x16x64xf32>,
    return
  }
  func.func @transform_0(%arg0: i32, %arg1: i32) -> (i32, i32, i32) {
    %c0_i32 = arith.constant 0 : i32
    %c0_i32_0 = arith.constant 0 : i32
    return %arg0, %arg1, %c0_i32 : i32, i32, i32
  }
  func.func @transform_1(%arg0: i32, %arg1: i32) -> (i32, i32) {
    %c0_i32 = arith.constant 0 : i32
    %c0_i32_0 = arith.constant 0 : i32
    %c0_i32_1 = arith.constant 0 : i32
    return %c0_i32, %c0_i32_0 : i32, i32
  }
  func.func @transform_2(%arg0: i32, %arg1: i32) -> (i32, i32) {
    %c0_i32 = arith.constant 0 : i32
    %c0_i32_0 = arith.constant 0 : i32
    %c0_i32_1 = arith.constant 0 : i32
    return %c0_i32, %c0_i32_0 : i32, i32
  }
  func.func @transform_3(%arg0: i32, %arg1: i32) -> (i32, i32, i32) {
    %c0_i32 = arith.constant 0 : i32
    %c0_i32_0 = arith.constant 0 : i32
    return %arg0, %arg1, %c0_i32 : i32, i32, i32
  }
  func.func @transform_4(%arg0: i32, %arg1: i32) -> (i32, i32, i32) {
    %c0_i32 = arith.constant 0 : i32
    %c0_i32_0 = arith.constant 0 : i32
    return %arg0, %arg1, %c0_i32 : i32, i32, i32
  }
}

</mosaic_0001>

<llo_original>
// kernel: tpu_custom_call.1
$region0: #{tpu_custom_call.1}
  #allocation0 [shape = 'u32[]', space=smem, size = 0x4, offset = 0x4, fixed_abs, tag = 'smem constant byte address 0x4 - core index']
  #allocation1 [shape = 'u32[72,128]{1,0:T(1,128)}', space=vmem, size = 0x9000, scoped, tag = 'internal scratch']
  %s0 = inlined_call_operand.hbm [shape: f32[2,32,32], index: 0, kind: input, shape index: {}]
  %s1 = inlined_call_operand.hbm [shape: f32[32,96], index: 1, kind: input, shape index: {}]
  %s2 = inlined_call_operand.vmem [shape: f32[1,96], index: 2, kind: input, shape index: {}]
  %s3 = inlined_call_operand.hbm [shape: f32[2,32,32], index: 3, kind: output, shape index: {0}]
  %s4 = inlined_call_operand.hbm [shape: f32[2,32,64], index: 4, kind: output, shape index: {1}]
  %5 = xla_tuple %s3, %s4
  %s6 = sld [smem:[#allocation0]]
  $region61: #{tpu_custom_call.1} parent=0
    _
  %s8 = ssub.s32 1, %s6
  %s9 = scalar_select 0, %s8, %s6
  $region1: #{tpu_custom_call.1} parent=0
    #allocation2 [shape = 'u8[16384]{0}', space=vmem, size = 0x4000, scoped, tag = 'input window, operand 0']
    #allocation3 [shape = 's32[2]{0}', space=sflag, size = 0x8, scoped, tag = 'scoped memory for tpu_custom_call.1']
    #allocation4 [shape = 's32[2]{0}', space=sflag, size = 0x8, scoped, tag = 'scoped memory for tpu_custom_call.1']
    #allocation5 [shape = 'u8[16384]{0}', space=vmem, size = 0x4000, scoped, tag = 'input window, operand 1, single buffered']
    #allocation6 [shape = 's32[1]{0}', space=sflag, size = 0x4, scoped, tag = 'scoped memory for tpu_custom_call.1']
    #allocation7 [shape = 'u8[16384]{0}', space=vmem, size = 0x4000, scoped, tag = 'output window, operand 0']
    #allocation8 [shape = 'u8[16384]{0}', space=vmem, size = 0x4000, scoped, tag = 'output window, operand 1']
    #allocation9 [shape = 's32[2]{0}', space=sflag, size = 0x8, scoped, tag = 'scoped memory for tpu_custom_call.1']
    %10 = vsyncpa [#allocation3], 0
    %s11 = scalar_lea.sflag [#allocation3], 1
    %12 = vsyncpa %s11, 0
    %13 = vsyncpa [#allocation6], 0
    %14 = vsyncpa [#allocation4], 0
    %s15 = scalar_lea.sflag [#allocation4], 1
    %16 = vsyncpa %s15, 0
    %17 = vsyncpa [#allocation9], 0
    %s18 = scalar_lea.sflag [#allocation9], 1
    %19 = vsyncpa %s18, 0
    loop: start=0, step=1, limit=6
    $region2: #{tpu_custom_call.1} parent=1 // loop_pre_header
      _
    $region3: #{tpu_custom_call.1} parent=1 // loop_header
      %s21 = sphi 0, %s25
      %p22 = scmp.ge.s32.totalorder %s21, 6
      %s28 = sphi 0, %s40
      %s29 = sphi 0, %s36
      %s30 = sphi 0, %s28
      %s31 = sphi 0, %s29
      %s32 = sphi 0, %s30
      %s33 = sphi 0, %s31
      %s45 = sphi 0, %s47
      %s48 = sphi 0, %s45
      %s49 = sphi 0, %s48
      %s65 = sphi 0, %s49
      %s69 = sphi 0, %s69
      %s71 = sphi 0, %s69
      %s72 = sphi 0, %s71
      %s86 = sphi 0, %s72
      %s90 = sphi 0, %s90
      %s92 = sphi 0, %s90
      %s93 = sphi 0, %s92
      %s107 = sphi 0, %s93
      %s115 = sphi 0, %s117
      %s118 = sphi 0, %s115
      %s119 = sphi 0, %s118
      %s135 = sphi 0, %s119
      %s143 = sphi 0, %s145
      %s146 = sphi 0, %s143
      %s147 = sphi 0, %s146
      %s163 = sphi 0, %s147
    $region4: #{tpu_custom_call.1} parent=1 // loop_header_branch
      %24 = sbr.rel (%p22) target = $region8
    $region5: #{tpu_custom_call.1} parent=1 // loop_body
      %s26 = ssub.s32 %s21, 1
      %s27 = ssub.s32 %s21, 2
      %s34 = sadd.s32 1, %s29
      %p35 = scmp.ge.s32.totalorder %s34, 2
      %s36 = scalar_select %p35, 0, %s34
      %s37 = sadd.s32 1, %s28
      %s38 = scalar_select %p35, %s37, %s28
      %p39 = scmp.ge.s32.totalorder %s38, 2
      %s40 = scalar_select %p39, 0, %s38
      %s41 = ssub.s32 %s28, %s40
      %s42 = ssub.s32 %s29, %s36
      %s43 = sor.u32 %s41, %s42
      %p44 = scmp.eq.s32.totalorder %s43, 0
      %s46 = sadd.s32 %s45, 1
      %s47 = scalar_select %p44, %s45, %s46
      %p50 = pneg %p44
      %p51 = scmp.eq.s32.totalorder %s21, 3
      %p52 = por %p50, %p51
      %p53 = scmp.ne.s32.totalorder %s45, %s48
      %p54 = scmp.eq.s32.totalorder %s21, 0
      %p55 = por %p53, %p54
      %p56 = scmp.ne.s32.totalorder %s45, %s48
      %p57 = scmp.eq.s32.totalorder %s26, 3
      %p58 = por %p56, %p57
      %p59 = scmp.ne.s32.totalorder %s48, %s49
      %p60 = scmp.eq.s32.totalorder %s26, 0
      %p61 = por %p59, %p60
      %p62 = scmp.ne.s32.totalorder %s48, %s49
      %p63 = scmp.eq.s32.totalorder %s27, 3
      %p64 = por %p62, %p63
      %p66 = scmp.ne.s32.totalorder %s49, %s65
      %p67 = scmp.eq.s32.totalorder %s27, 0
      %p68 = por %p66, %p67
      %s70 = sadd.s32 %s69, 1
      %p73 = scmp.eq.s32.totalorder %s21, 3
      %p74 = scmp.ne.s32.totalorder %s69, %s71
      %p75 = scmp.eq.s32.totalorder %s21, 0
      %p76 = por %p74, %p75
      %p77 = scmp.ne.s32.totalorder %s69, %s71
      %p78 = scmp.eq.s32.totalorder %s26, 3
      %p79 = por %p77, %p78
      %p80 = scmp.ne.s32.totalorder %s71, %s72
      %p81 = scmp.eq.s32.totalorder %s26, 0
      %p82 = por %p80, %p81
      %p83 = scmp.ne.s32.totalorder %s71, %s72
      %p84 = scmp.eq.s32.totalorder %s27, 3
      %p85 = por %p83, %p84
      %p87 = scmp.ne.s32.totalorder %s72, %s86
      %p88 = scmp.eq.s32.totalorder %s27, 0
      %p89 = por %p87, %p88
      %s91 = sadd.s32 %s90, 1
      %p94 = scmp.eq.s32.totalorder %s21, 3
      %p95 = scmp.ne.s32.totalorder %s90, %s92
      %p96 = scmp.eq.s32.totalorder %s21, 0
      %p97 = por %p95, %p96
      %p98 = scmp.ne.s32.totalorder %s90, %s92
      %p99 = scmp.eq.s32.totalorder %s26, 3
      %p100 = por %p98, %p99
      %p101 = scmp.ne.s32.totalorder %s92, %s93
      %p102 = scmp.eq.s32.totalorder %s26, 0
      %p103 = por %p101, %p102
      %p104 = scmp.ne.s32.totalorder %s92, %s93
      %p105 = scmp.eq.s32.totalorder %s27, 3
      %p106 = por %p104, %p105
      %p108 = scmp.ne.s32.totalorder %s93, %s107
      %p109 = scmp.eq.s32.totalorder %s27, 0
      %p110 = por %p108, %p109
      %s111 = ssub.s32 %s28, %s40
      %s112 = ssub.s32 %s29, %s36
      %s113 = sor.u32 %s111, %s112
      %p114 = scmp.eq.s32.totalorder %s113, 0
      %s116 = sadd.s32 %s115, 1
      %s117 = scalar_select %p114, %s115, %s116
      %p120 = pneg %p114
      %p121 = scmp.eq.s32.totalorder %s21, 3
      %p122 = por %p120, %p121
      %p123 = scmp.ne.s32.totalorder %s115, %s118
      %p124 = scmp.eq.s32.totalorder %s21, 0
      %p125 = por %p123, %p124
      %p126 = scmp.ne.s32.totalorder %s115, %s118
      %p127 = scmp.eq.s32.totalorder %s26, 3
      %p128 = por %p126, %p127
      %p129 = scmp.ne.s32.totalorder %s118, %s119
      %p130 = scmp.eq.s32.totalorder %s26, 0
      %p131 = por %p129, %p130
      %p132 = scmp.ne.s32.totalorder %s118, %s119
      %p133 = scmp.eq.s32.totalorder %s27, 3
      %p134 = por %p132, %p133
      %p136 = scmp.ne.s32.totalorder %s119, %s135
      %p137 = scmp.eq.s32.totalorder %s27, 0
      %p138 = por %p136, %p137
      %s139 = ssub.s32 %s28, %s40
      %s140 = ssub.s32 %s29, %s36
      %s141 = sor.u32 %s139, %s140
      %p142 = scmp.eq.s32.totalorder %s141, 0
      %s144 = sadd.s32 %s143, 1
      %s145 = scalar_select %p142, %s143, %s144
      %p148 = pneg %p142
      %p149 = scmp.eq.s32.totalorder %s21, 3
      %p150 = por %p148, %p149
      %p151 = scmp.ne.s32.totalorder %s143, %s146
      %p152 = scmp.eq.s32.totalorder %s21, 0
      %p153 = por %p151, %p152
      %p154 = scmp.ne.s32.totalorder %s143, %s146
      %p155 = scmp.eq.s32.totalorder %s26, 3
      %p156 = por %p154, %p155
      %p157 = scmp.ne.s32.totalorder %s146, %s147
      %p158 = scmp.eq.s32.totalorder %s26, 0
      %p159 = por %p157, %p158
      %p160 = scmp.ne.s32.totalorder %s146, %s147
      %p161 = scmp.eq.s32.totalorder %s27, 3
      %p162 = por %p160, %p161
      %p164 = scmp.ne.s32.totalorder %s147, %s163
      %p165 = scmp.eq.s32.totalorder %s27, 0
      %p166 = por %p164, %p165
      %p167 = scmp.le.s32.totalorder 1, %s21
      %p168 = scmp.lt.s32.totalorder %s21, 5
      %p169 = pnand %p167, %p168
      %p170 = pneg %p169
      // Predicated region
      $region9: #{tpu_custom_call.1} parent=5 // pred_check
        _
      $region10: #{tpu_custom_call.1} parent=5 // pred_check_branch
        %172 = sbr.rel (%p169) target = $region12
      $region11: #{tpu_custom_call.1} parent=5 // pred_region
        %s173 = ssub.s32 %s21, 1
        // Predicated region
        $region13: #{tpu_custom_call.1} parent=11 // pred_check
          %p174 = pneg %p82
        $region14: #{tpu_custom_call.1} parent=11 // pred_check_branch
          %176 = sbr.rel (%p174) target = $region16
        $region15: #{tpu_custom_call.1} parent=11 // pred_region
          %178 = vsyncadd [#allocation6], 0
          %s179 = sshll.u32 %s1, 4
          %s180 = int_to_ptr.hbm [resolvable:$true] %s179
          %s181 = sshll.u32 [#allocation5], 4
          %s182 = int_to_ptr.vmem [resolvable:$true] %s181
          %187 = dma.hbm_to_vmem [thread:$0]  %s180, 512, %s182, [#allocation6], 128, 128, 8
        $region16: #{tpu_custom_call.1} parent=11 // pred_fallthru
          _
        // Predicated region
        $region17: #{tpu_custom_call.1} parent=11 // pred_check
          %p188 = pneg %p103
        $region18: #{tpu_custom_call.1} parent=11 // pred_check_branch
          %190 = sbr.rel (%p188) target = $region20
        $region19: #{tpu_custom_call.1} parent=11 // pred_region
          _
        $region20: #{tpu_custom_call.1} parent=11 // pred_fallthru
          _
      $region12: #{tpu_custom_call.1} parent=5 // pred_fallthru
        _
      %p191 = scmp.lt.s32.totalorder %s21, 4
      // Predicated region
      $region21: #{tpu_custom_call.1} parent=5 // pred_check
        %p192 = pneg %p191
      $region22: #{tpu_custom_call.1} parent=5 // pred_check_branch
        %194 = sbr.rel (%p192) target = $region24
      $region23: #{tpu_custom_call.1} parent=5 // pred_region
        // Predicated region
        $region25: #{tpu_custom_call.1} parent=23 // pred_check
          %p195 = pneg %p55
        $region26: #{tpu_custom_call.1} parent=23 // pred_check_branch
          %197 = sbr.rel (%p195) target = $region28
        $region27: #{tpu_custom_call.1} parent=23 // pred_region
          %s198 = sand.u32 %s45, 1
          %s199 = scalar_lea.sflag [#allocation3], %s198
          %s200 = sand.u32 %s45, 1
          %s201 = smul.addr %s200, 16
          %s202 = scalar_lea.vmem [#allocation2], %s201
          %s203 = smul.u32 2, %s29
          %205 = vsyncadd %s199, 0
          %s206 = smul.addr %s28, 4
          %s207 = sadd.s32 %s203, %s206
          %s208 = smul.addr %s207, 8
          %s209 = scalar_lea.hbm %s0, %s208
          %s210 = sshll.u32 %s209, 4
          %s211 = int_to_ptr.hbm [resolvable:$true] %s210
          %s212 = sshll.u32 %s202, 4
          %s213 = int_to_ptr.vmem [resolvable:$true] %s212
          %218 = dma.hbm_to_vmem [thread:$0]  %s211, 256, %s213, %s199, 128, 128, 8
        $region28: #{tpu_custom_call.1} parent=23 // pred_fallthru
          _
      $region24: #{tpu_custom_call.1} parent=5 // pred_fallthru
        _
      %p219 = scmp.le.s32.totalorder 1, %s21
      %p220 = scmp.lt.s32.totalorder %s21, 5
      %p221 = pnand %p219, %p220
      %p222 = pneg %p221
      // Predicated region
      $region29: #{tpu_custom_call.1} parent=5 // pred_check
        _
      $region30: #{tpu_custom_call.1} parent=5 // pred_check_branch
        %224 = sbr.rel (%p221) target = $region32
      $region31: #{tpu_custom_call.1} parent=5 // pred_region
        %s225 = ssub.s32 %s21, 1
        %s226 = sand.u32 %s48, 1
        %s227 = scalar_lea.sflag [#allocation3], %s226
        %s228 = sand.u32 %s48, 1
        %s229 = smul.addr %s228, 16
        %s230 = scalar_lea.vmem [#allocation2], %s229
        // Predicated region
        $region33: #{tpu_custom_call.1} parent=31 // pred_check
          %p231 = pneg %p61
        $region34: #{tpu_custom_call.1} parent=31 // pred_check_branch
          %233 = sbr.rel (%p231) target = $region36
        $region35: #{tpu_custom_call.1} parent=31 // pred_region
          %235 = dma.done %s227, 256
        $region36: #{tpu_custom_call.1} parent=31 // pred_fallthru
          _
        // Predicated region
        $region37: #{tpu_custom_call.1} parent=31 // pred_check
          %p236 = pneg %p82
        $region38: #{tpu_custom_call.1} parent=31 // pred_check_branch
          %238 = sbr.rel (%p236) target = $region40
        $region39: #{tpu_custom_call.1} parent=31 // pred_region
          %240 = dma.done [#allocation6], 512
        $region40: #{tpu_custom_call.1} parent=31 // pred_fallthru
          _
        %s241 = sand.u32 %s48, 1
        %s242 = scalar_lea.sflag [#allocation3], %s241
        %s243 = sand.u32 %s48, 1
        %s244 = smul.addr %s243, 16
        %s245 = scalar_lea.vmem [#allocation2], %s244
        %p246 = pneg %p61
        %p247 = pneg %p58
        %p248 = pneg %p82
        %p249 = pneg %p79
        %p250 = pneg %p103
        %p251 = pneg %p100
        %p252 = pneg %p131
        %p253 = pneg %p128
        %s254 = sand.u32 %s118, 1
        %s255 = scalar_lea.sflag [#allocation4], %s254
        %s256 = sand.u32 %s118, 1
        %s257 = smul.addr %s256, 16
        %s258 = scalar_lea.vmem [#allocation7], %s257
        %p259 = pneg %p159
        %p260 = pneg %p156
        %s261 = sand.u32 %s146, 1
        %s262 = scalar_lea.sflag [#allocation9], %s261
        %s263 = sand.u32 %s146, 1
        %s264 = smul.addr %s263, 16
        %s265 = scalar_lea.vmem [#allocation8], %s264
        %s266 = smul.u32 2, %s31
        %s267 = smul.u32 2, %s31
        %s268 = smul.u32 2, %s31
        %v269 = vld [vmem:[%s230] sm:$0xff]
        %v270 = vld [vmem:[%s230 + $0x8] sm:$0xff]
        %v271 = vld [vmem:[#allocation5] sm:$0xff]
        %v272 = vld [vmem:[#allocation5 + $0x8] sm:$0xff]
        %v273 = vld [vmem:[#allocation5 + $0x10] sm:$0xff]
        %v274 = vld [vmem:[#allocation5 + $0x18] sm:$0xff]
        %v275 = vld [vmem:[%s2] sm:$0x1]
        %v277 = vperm.slane %v275, 0
        %vm279 = vcmask 261120
        %v281 = vsel %vm279, %v269, 0
        %v284 = vsel %vm279, %v270, 0
        %286 = vmatpush.msra.mxu0 0.0
        %287 = vmatpush.msra.mxu0 0.0
        %288 = vmatpush.msra.mxu0 0.0
        %289 = vmatpush.msra.mxu0 0.0
        %290 = vmatpush.msra.mxu0 0.0
        %291 = vmatpush.msra.mxu0 0.0
        %292 = vmatpush.msra.mxu0 0.0
        %293 = vmatpush.msra.mxu0 0.0
        %294 = vmatpush.msra.mxu0 0.0
        %295 = vmatpush.msra.mxu0 0.0
        %296 = vmatpush.msra.mxu0 0.0
        %297 = vmatpush.msra.mxu0 0.0
        %298 = vmatpush.msra.mxu0 %v274
        %299 = vmatpush.msra.mxu0 %v273
        %300 = vmatpush.msra.mxu0 %v272
        %301 = vmatpush.msra.mxu0 %v271
        %302 = vmatmul.f32.gmra.mxu0 %v281
        %v303 = vpop.f32.mrf.mxu0
        %v304 = vadd.f32 %v277, %v303
        %305 = vmatmul.f32.gmra.mxu0 %v284
        %v306 = vpop.f32.mrf.mxu0
        %v307 = vadd.f32 %v277, %v306
        %308 = vdwg.mxu0
        %309 = vst.msk [vmem:[%s258] sm:$0xff] %vm279, %v304
        %310 = vst.msk [vmem:[%s258 + $0x8] sm:$0xff] %vm279, %v307
        %313 = vrot.lane.b32.xlu0 %v304, 96
        %v314 = vpop.permute.xlu0 %313
        %315 = vrot.lane.b32.xlu0 %v307, 96
        %v316 = vpop.permute.xlu0 %315
        %vm319 = vcmask 523264
        %320 = vst.msk [vmem:[%s265] sm:$0xff] %vm319, %v314
        %321 = vst.msk [vmem:[%s265 + $0x8] sm:$0xff] %vm319, %v316
        %s322 = sand.u32 %s118, 1
        %s323 = scalar_lea.sflag [#allocation4], %s322
        %s324 = sand.u32 %s118, 1
        %s325 = smul.addr %s324, 16
        %s326 = scalar_lea.vmem [#allocation7], %s325
        %s327 = sand.u32 %s146, 1
        %s328 = scalar_lea.sflag [#allocation9], %s327
        %s329 = sand.u32 %s146, 1
        %s330 = smul.addr %s329, 16
        %s331 = scalar_lea.vmem [#allocation8], %s330
        // Predicated region
        $region41: #{tpu_custom_call.1} parent=31 // pred_check
          %p332 = pneg %p128
        $region42: #{tpu_custom_call.1} parent=31 // pred_check_branch
          %334 = sbr.rel (%p332) target = $region44
        $region43: #{tpu_custom_call.1} parent=31 // pred_region
          %s335 = smul.u32 2, %s31
          %337 = vsyncadd %s323, 0
          %s338 = smul.addr %s30, 4
          %s339 = sadd.s32 %s335, %s338
          %s340 = smul.addr %s339, 8
          %s341 = scalar_lea.hbm %s3, %s340
          %s342 = sshll.u32 %s326, 4
          %s343 = int_to_ptr.vmem [resolvable:$true] %s342
          %s344 = sshll.u32 %s341, 4
          %s345 = int_to_ptr.hbm [resolvable:$true] %s344
          %350 = dma.vmem_to_hbm [thread:$0]  %s343, 256, %s345, %s323, 128, 128, 8
        $region44: #{tpu_custom_call.1} parent=31 // pred_fallthru
          _
        // Predicated region
        $region45: #{tpu_custom_call.1} parent=31 // pred_check
          %p351 = pneg %p156
        $region46: #{tpu_custom_call.1} parent=31 // pred_check_branch
          %353 = sbr.rel (%p351) target = $region48
        $region47: #{tpu_custom_call.1} parent=31 // pred_region
          %s354 = smul.u32 2, %s31
          %356 = vsyncadd %s328, 0
          %s357 = smul.addr %s30, 4
          %s358 = sadd.s32 %s354, %s357
          %s359 = smul.addr %s358, 8
          %s360 = scalar_lea.hbm %s4, %s359
          %s361 = sshll.u32 %s331, 4
          %s362 = int_to_ptr.vmem [resolvable:$true] %s361
          %s363 = sshll.u32 %s360, 4
          %s364 = int_to_ptr.hbm [resolvable:$true] %s363
          %369 = dma.vmem_to_hbm [thread:$0]  %s362, 256, %s364, %s328, 128, 128, 8
        $region48: #{tpu_custom_call.1} parent=31 // pred_fallthru
          _
      $region32: #{tpu_custom_call.1} parent=5 // pred_fallthru
        _
      %p370 = scmp.le.s32.totalorder 2, %s21
      // Predicated region
      $region49: #{tpu_custom_call.1} parent=5 // pred_check
        %p371 = pneg %p370
      $region50: #{tpu_custom_call.1} parent=5 // pred_check_branch
        %373 = sbr.rel (%p371) target = $region52
      $region51: #{tpu_custom_call.1} parent=5 // pred_region
        %s374 = ssub.s32 %s21, 2
        // Predicated region
        $region53: #{tpu_custom_call.1} parent=51 // pred_check
          %p375 = pneg %p134
        $region54: #{tpu_custom_call.1} parent=51 // pred_check_branch
          %377 = sbr.rel (%p375) target = $region56
        $region55: #{tpu_custom_call.1} parent=51 // pred_region
          %s378 = sand.u32 %s119, 1
          %s379 = scalar_lea.sflag [#allocation4], %s378
          %s380 = sand.u32 %s119, 1
          %s381 = smul.addr %s380, 16
          %s382 = scalar_lea.vmem [#allocation7], %s381
          %384 = dma.done %s379, 256
        $region56: #{tpu_custom_call.1} parent=51 // pred_fallthru
          _
        // Predicated region
        $region57: #{tpu_custom_call.1} parent=51 // pred_check
          %p385 = pneg %p162
        $region58: #{tpu_custom_call.1} parent=51 // pred_check_branch
          %387 = sbr.rel (%p385) target = $region60
        $region59: #{tpu_custom_call.1} parent=51 // pred_region
          %s388 = sand.u32 %s147, 1
          %s389 = scalar_lea.sflag [#allocation9], %s388
          %s390 = sand.u32 %s147, 1
          %s391 = smul.addr %s390, 16
          %s392 = scalar_lea.vmem [#allocation8], %s391
          %394 = dma.done %s389, 256
        $region60: #{tpu_custom_call.1} parent=51 // pred_fallthru
          _
      $region52: #{tpu_custom_call.1} parent=5 // pred_fallthru
        _
    $region6: #{tpu_custom_call.1} parent=1 // loop_footer
      %s25 = sadd.s32 1, %s21
    $region7: #{tpu_custom_call.1} parent=1 // loop_footer_branch
      %20 = sbr.rel target = $region3
    $region8: #{tpu_custom_call.1} parent=1 // loop_exit
      _
    %395 = vsyncpa [#allocation3], 1
    %s396 = scalar_lea.sflag [#allocation3], 1
    %397 = vsyncpa %s396, 1
    %398 = vsyncpa [#allocation6], 1
    %399 = vsyncpa [#allocation4], 1
    %s400 = scalar_lea.sflag [#allocation4], 1
    %401 = vsyncpa %s400, 1
    %402 = vsyncpa [#allocation9], 1
    %s403 = scalar_lea.sflag [#allocation9], 1
    %404 = vsyncpa %s403, 1

</llo_original>
